<compile_context>
chip_gen: v7x
topology: tpu7x:2x2x1
jax: 0.10.0
libtpu: 0.0.40
codegen_flags: <defaults>
</compile_context>

<pallas_src>
import functools

import jax
import jax.numpy as jnp
from jax.experimental import pallas as pl
from jax.experimental.pallas import tpu as pltpu


_STAGE_KEYS = ('wqkv', 'bqkv', 'wm', 'bm', 'g1', 'be1',
               'w1', 'b1', 'w2', 'b2', 'g2', 'be2')
_VMEM_LIMIT = 32 * 1024 * 1024


def _w_spec(shape):
    zeros = (0,) * len(shape)
    return pl.BlockSpec(shape, lambda i, _z=zeros: _z)


# ----------------------------------------------------------------------------
# In-kernel building blocks (shared by the coarse and fine fused kernels)
# ----------------------------------------------------------------------------
def _mm(a16, w16):
    """Matmul over the last dim (leading dims flattened); f32 accumulation."""
    shp = a16.shape
    out = jnp.dot(a16.reshape(-1, shp[-1]), w16,
                  preferred_element_type=jnp.float32)
    return out.reshape(shp[:-1] + (w16.shape[-1],))


def _layer_norm(x, g, b, eps):
    mu = jnp.mean(x, axis=-1, keepdims=True)
    xc = x - mu
    var = jnp.mean(xc * xc, axis=-1, keepdims=True)
    return xc * jax.lax.rsqrt(var + eps) * g + b


def _encoder_layer(x, s, is_self, *, wqkv, bqkv, wm, bm, g1, be1,
                   w1, b1, w2, b2, g2, be2, scale, eps):
    """One LoFTR encoder layer. x: [..., Lx, D] f32, s: [..., Ls, D] f32.
    Weights are bf16 (stored that way in HBM); accumulation in f32.
    TODO(synk): single-head softmax attention; the reference LoFTR layer may
    use multi-head / linear attention depending on config."""
    f32, bf16 = jnp.float32, jnp.bfloat16
    d = x.shape[-1]
    x16 = x.astype(bf16)
    if is_self:
        qkv = _mm(x16, wqkv) + bqkv                         # one [L,D]x[D,3D]
        q, k, v = qkv[..., :d], qkv[..., d:2 * d], qkv[..., 2 * d:]
    else:
        s16 = s.astype(bf16)
        q = _mm(x16, wqkv[:, :d]) + bqkv[..., :d]
        kv = _mm(s16, wqkv[:, d:]) + bqkv[..., d:]          # one [Ls,D]x[D,2D]
        k, v = kv[..., :d], kv[..., d:]
    q = q * scale                                           # scale folded into q
    q16, k16, v16 = q.astype(bf16), k.astype(bf16), v.astype(bf16)

    if x.ndim == 2:
        att = jax.lax.dot_general(q16, k16, (((1,), (1,)), ((), ())),
                                  preferred_element_type=f32)
        att = att - jnp.max(att, axis=-1, keepdims=True)
        p = jnp.exp(att)
        p = p * pl.reciprocal(jnp.sum(p, axis=-1, keepdims=True), approx=True)
        msg = jnp.dot(p.astype(bf16), v16, preferred_element_type=f32)
    else:
        att = jnp.einsum('bqd,bkd->bqk', q16, k16, preferred_element_type=f32)
        att = att - jnp.max(att, axis=-1, keepdims=True)
        p = jnp.exp(att)
        p = p * pl.reciprocal(jnp.sum(p, axis=-1, keepdims=True), approx=True)
        msg = jnp.einsum('bqk,bkd->bqd', p.astype(bf16), v16,
                         preferred_element_type=f32)

    msg = _mm(msg.astype(bf16), wm) + bm
    msg = _layer_norm(msg, g1, be1, eps)

    # MLP on concat([x, msg]) without a lane concat: split W1 rows (aligned).
    h = _mm(x16, w1[:d, :]) + _mm(msg.astype(bf16), w1[d:, :]) + b1
    h = jnp.maximum(h, 0.0)
    h = _mm(h.astype(bf16), w2) + b2
    h = _layer_norm(h, g2, be2, eps)
    return x + h


def _run_stage(fi, fp, refs, layer_names, scale, eps):
    """Unrolled (static) LoFTR self/cross layer schedule over one stage."""
    (wqkv, bqkv, wm, bm, g1, be1, w1, b1, w2, b2, g2, be2) = refs
    for l, name in enumerate(layer_names):
        prm = dict(wqkv=wqkv[l], bqkv=bqkv[l], wm=wm[l], bm=bm[l],
                   g1=g1[l], be1=be1[l], w1=w1[l], b1=b1[l],
                   w2=w2[l], b2=b2[l], g2=g2[l], be2=be2[l],
                   scale=scale, eps=eps)
        if name == 'self':
            fi = _encoder_layer(fi, fi, True, **prm)
            fp = _encoder_layer(fp, fp, True, **prm)
        else:  # 'cross' — sequential update, matching the LoFTR reference
            fi = _encoder_layer(fi, fp, False, **prm)
            fp = _encoder_layer(fp, fi, False, **prm)
    return fi, fp


# ----------------------------------------------------------------------------
# Fused stage kernels
# ----------------------------------------------------------------------------
def _coarse_stage_kernel(fi_ref, fp_ref,
                         wqkv_ref, bqkv_ref, wm_ref, bm_ref, g1_ref, be1_ref,
                         w1_ref, b1_ref, w2_ref, b2_ref, g2_ref, be2_ref,
                         conf_ref, *, layer_names, scale, eps, inv_temp,
                         norm_eps):
    refs = (wqkv_ref, bqkv_ref, wm_ref, bm_ref, g1_ref, be1_ref,
            w1_ref, b1_ref, w2_ref, b2_ref, g2_ref, be2_ref)
    fi, fp = _run_stage(fi_ref[0], fp_ref[0], refs, layer_names, scale, eps)

    # F.normalize(dim=-1) + dual softmax.  Exact division (feeds conf_matrix /
    # top-k match selection, so no approx reciprocal here).
    fi = fi / jnp.maximum(jnp.sqrt(jnp.sum(fi * fi, -1, keepdims=True)), norm_eps)
    fp = fp / jnp.maximum(jnp.sqrt(jnp.sum(fp * fp, -1, keepdims=True)), norm_eps)
    sim = jax.lax.dot_general(fi.astype(jnp.bfloat16), fp.astype(jnp.bfloat16),
                              (((1,), (1,)), ((), ())),
                              preferred_element_type=jnp.float32) * inv_temp
    # TODO(synk): flash-style row tiling of the dual softmax is needed at real
    # LoFTR resolutions (v7x 64 MiB VMEM); one block suffices at demo sizes.
    e0 = jnp.exp(sim - jnp.max(sim, axis=0, keepdims=True))
    s0 = e0 / jnp.sum(e0, axis=0, keepdims=True)
    e1 = jnp.exp(sim - jnp.max(sim, axis=1, keepdims=True))
    s1 = e1 / jnp.sum(e1, axis=1, keepdims=True)
    conf_ref[0] = s0 * s1


def coarse_stage(fi, fp, stage, layer_names, d, temperature):
    b, li, _ = fi.shape
    lp = fp.shape[1]
    kernel = functools.partial(_coarse_stage_kernel,
                               layer_names=tuple(layer_names),
                               scale=1.0 / float(d) ** 0.5, eps=1e-5,
                               inv_temp=1.0 / temperature, norm_eps=1e-12)
    return pl.pallas_call(
        kernel,
        out_shape=jax.ShapeDtypeStruct((b, li, lp), jnp.float32),
        grid=(b,),
        in_specs=[pl.BlockSpec((1, li, d), lambda i: (i, 0, 0)),
                  pl.BlockSpec((1, lp, d), lambda i: (i, 0, 0))]
                 + [_w_spec(stage[k].shape) for k in _STAGE_KEYS],
        out_specs=pl.BlockSpec((1, li, lp), lambda i: (i, 0, 0)),
        compiler_params=pltpu.CompilerParams(
            dimension_semantics=("parallel",),
            vmem_limit_bytes=_VMEM_LIMIT),
    )(fi, fp, *[stage[k] for k in _STAGE_KEYS])


def _fine_stage_kernel(fiu_ref, fpu_ref, grid_ref,
                       wqkv_ref, bqkv_ref, wm_ref, bm_ref, g1_ref, be1_ref,
                       w1_ref, b1_ref, w2_ref, b2_ref, g2_ref, be2_ref,
                       expec_ref, *, layer_names, scale, eps):
    refs = (wqkv_ref, bqkv_ref, wm_ref, bm_ref, g1_ref, be1_ref,
            w1_ref, b1_ref, w2_ref, b2_ref, g2_ref, be2_ref)
    fi, fp = _run_stage(fiu_ref[...], fpu_ref[...], refs, layer_names,
                        scale, eps)
    # Fine expectation over the w x w window (fused: saves one launch and the
    # (m,2) masked-store kernel — output is a lane-dense padded [tb,128]).
    sim = jnp.sum(fi * fp, axis=-1) * scale                 # [tb, w*w]
    sim = sim - jnp.max(sim, axis=-1, keepdims=True)
    p = jnp.exp(sim)
    p = p / jnp.sum(p, axis=-1, keepdims=True)
    expec_ref[0] = jnp.dot(p, grid_ref[...], preferred_element_type=jnp.float32)


def fine_stage(fiu, fpu, grid_pad, stage, layer_names, d):
    k, ww, _ = fiu.shape
    tb = k // 2 if (k % 2 == 0 and k >= 4) else k           # 2 parallel steps
    nb = k // tb
    kernel = functools.partial(_fine_stage_kernel,
                               layer_names=tuple(layer_names),
                               scale=1.0 / float(d) ** 0.5, eps=1e-5)
    expec = pl.pallas_call(
        kernel,
        out_shape=jax.ShapeDtypeStruct((nb, tb, 128), jnp.float32),
        grid=(nb,),
        in_specs=[pl.BlockSpec((tb, ww, d), lambda i: (i, 0, 0)),
                  pl.BlockSpec((tb, 1, d), lambda i: (i, 0, 0)),
                  pl.BlockSpec(grid_pad.shape, lambda i: (0, 0))]
                 + [_w_spec(stage[kk].shape) for kk in _STAGE_KEYS],
        out_specs=pl.BlockSpec((1, tb, 128), lambda i: (i, 0, 0)),
        compiler_params=pltpu.CompilerParams(
            dimension_semantics=("parallel",),
            vmem_limit_bytes=_VMEM_LIMIT),
    )(fiu, fpu, grid_pad, *[stage[kk] for kk in _STAGE_KEYS])
    return expec.reshape(k, 128)[:, :2]


# ----------------------------------------------------------------------------
# Linear / conv-as-matmul kernel (image & point backbones)
# ----------------------------------------------------------------------------
def _linear_kernel(x_ref, w_ref, b_ref, o_ref, *, relu):
    acc = jnp.dot(x_ref[...].astype(jnp.bfloat16), w_ref[...],
                  preferred_element_type=jnp.float32) + b_ref[...]
    if relu:
        acc = jnp.maximum(acc, 0.0)
    o_ref[...] = acc


def _pick_row_tile(m):
    # Single TC (v5e/v6e): prefer one big block (fewer grid steps, better HBM
    # roofline).  Only split very large row counts so v7x's second TensorCore
    # gets a parallel step.
    if m >= 1024 and m % 256 == 0:
        return 256
    return m


def linear(x, w, b, relu=False):
    # x: [M, K] f32, w: [K, N] bf16, b: [N] f32
    m, k = x.shape
    n = w.shape[1]
    tm = _pick_row_tile(m)
    return pl.pallas_call(
        functools.partial(_linear_kernel, relu=relu),
        out_shape=jax.ShapeDtypeStruct((m, n), jnp.float32),
        grid=(m // tm,),
        in_specs=[pl.BlockSpec((tm, k), lambda i: (i, 0)),
                  pl.BlockSpec((k, n), lambda i: (0, 0)),
                  pl.BlockSpec((1, n), lambda i: (0, 0))],
        out_specs=pl.BlockSpec((tm, n), lambda i: (i, 0)),
        compiler_params=pltpu.CompilerParams(
            dimension_semantics=("parallel",),
            vmem_limit_bytes=_VMEM_LIMIT),
    )(x, w, b.reshape(1, n))


# ----------------------------------------------------------------------------
# Glue helpers (plain JAX): im2col, positional encodings, gathers
# ----------------------------------------------------------------------------
def im2col(x, k, stride, pad):
    # TODO(synk): at real image sizes fuse the conv chain in one kernel with
    # in-kernel kxk shifted-slice accumulation to avoid the 9x HBM expansion.
    x = jnp.pad(x, ((0, 0), (pad, pad), (pad, pad), (0, 0)))
    n, h, w, c = x.shape
    oh = (h - k) // stride + 1
    ow = (w - k) // stride + 1
    cols = []
    for di in range(k):
        for dj in range(k):
            cols.append(x[:, di:di + stride * oh:stride,
                          dj:dj + stride * ow:stride, :])
    cols = jnp.concatenate(cols, axis=-1)                  # [N, oh, ow, k*k*C]
    return cols.reshape(n * oh * ow, k * k * c), oh, ow


def conv2d(x, p, k, stride, pad, relu=False):
    # x NHWC f32, p['w'] [k*k*Cin (padded to mult of 8), Cout] bf16
    n = x.shape[0]
    cols, oh, ow = im2col(x, k, stride, pad)
    krows = p['w'].shape[0]
    if krows > cols.shape[1]:
        cols = jnp.pad(cols, ((0, 0), (0, krows - cols.shape[1])))
    y = linear(cols, p['w'], p['b'], relu=relu)
    return y.reshape(n, oh, ow, -1)


def pos_encoding_2d(hc, wc, d_model):
    ys, xs = jnp.meshgrid(jnp.arange(hc, dtype=jnp.float32),
                          jnp.arange(wc, dtype=jnp.float32), indexing='ij')
    nfreq = d_model // 4
    div = jnp.exp(jnp.arange(nfreq, dtype=jnp.float32) *
                  (-jnp.log(10000.0) / nfreq))
    xe = xs[..., None] * div
    ye = ys[..., None] * div
    pe = jnp.concatenate([jnp.sin(xe), jnp.cos(xe),
                          jnp.sin(ye), jnp.cos(ye)], axis=-1)
    return pe.reshape(1, hc * wc, d_model)


def pos_encoding_xy(points, d_model):
    nfreq = d_model // 4
    div = jnp.exp(jnp.arange(nfreq, dtype=jnp.float32) *
                  (-jnp.log(10000.0) / nfreq))
    x = points[..., 0:1] * div
    y = points[..., 1:2] * div
    return jnp.concatenate([jnp.sin(x), jnp.cos(x),
                            jnp.sin(y), jnp.cos(y)], axis=-1)


# ----------------------------------------------------------------------------
# Modules
# ----------------------------------------------------------------------------
def image_backbone(params, image_nchw):
    x = jnp.transpose(image_nchw, (0, 2, 3, 1))            # NCHW -> NHWC
    x = conv2d(x, params['conv1'], 3, 2, 1, relu=True)
    feats_f = conv2d(x, params['conv2'], 3, 1, 1, relu=True)
    x = conv2d(feats_f, params['conv3'], 3, 2, 1, relu=True)
    feats_c = conv2d(x, params['conv4'], 3, 2, 1, relu=False)
    return feats_c, feats_f                                 # NHWC


def point_backbone(params, features, point_stride):
    f = linear(features, params['fc1']['w'], params['fc1']['b'], relu=True)
    feats_f = linear(f, params['fc2']['w'], params['fc2']['b'], relu=False)
    coarse_in = feats_f[::point_stride]
    feats_c = linear(coarse_in, params['fc3']['w'], params['fc3']['b'], relu=False)
    return feats_c[None], feats_f[None]                     # [1,Nc,D], [1,Nf,D]


def fine_preprocess(feats_image_f, feats_point_f, data):
    hc, wc = data['hw_c']
    w = data['scale_f_c']
    c = feats_image_f.shape[-1]
    win = feats_image_f[0].reshape(hc, w, wc, w, c).transpose(0, 2, 1, 3, 4)
    win = win.reshape(hc * wc, w * w, c)
    feat_image_unfold = jnp.take(win, data['i_ids'], axis=0)      # [K, w*w, C]
    fine_ids = data['j_ids'] * data['point_stride']
    feat_point_unfold = jnp.take(feats_point_f[0], fine_ids, axis=0)[:, None, :]
    return feat_image_unfold, feat_point_unfold


# ----------------------------------------------------------------------------
# Parameters (deterministic synthetic init) and full forward
# ----------------------------------------------------------------------------
def init_linear(key, din, dout):
    kw, kb = jax.random.split(key)
    w = jax.random.normal(kw, (din, dout), jnp.float32) / jnp.sqrt(float(din))
    b = 0.01 * jax.random.normal(kb, (dout,), jnp.float32)
    return {'w': w.astype(jnp.bfloat16), 'b': b}


def init_conv(key, cin, cout, k):
    kin = k * k * cin
    w = jax.random.normal(key, (kin, cout), jnp.float32) / jnp.sqrt(float(kin))
    pad = (-kin) % 8
    if pad:
        w = jnp.pad(w, ((0, pad), (0, 0)))
    return {'w': w.astype(jnp.bfloat16), 'b': jnp.zeros((cout,), jnp.float32)}


def init_encoder_layer(key, d):
    ks = jax.random.split(key, 8)

    def mat(k, din, dout):
        return jax.random.normal(k, (din, dout), jnp.float32) / jnp.sqrt(float(din))

    def vec(k, n):
        return 0.01 * jax.random.normal(k, (n,), jnp.float32)

    wqkv = jnp.concatenate([mat(ks[0], d, d), mat(ks[1], d, d),
                            mat(ks[2], d, d)], axis=1)              # [d, 3d]
    return {
        'wqkv': wqkv.astype(jnp.bfloat16),
        'bqkv': vec(ks[3], 3 * d).reshape(1, 3 * d),
        'wm': mat(ks[4], d, d).astype(jnp.bfloat16),
        'bm': vec(ks[4], d).reshape(1, d),
        'g1': jnp.ones((1, d), jnp.float32),
        'be1': jnp.zeros((1, d), jnp.float32),
        'w1': mat(ks[5], 2 * d, 2 * d).astype(jnp.bfloat16),
        'b1': vec(ks[5], 2 * d).reshape(1, 2 * d),
        'w2': mat(ks[6], 2 * d, d).astype(jnp.bfloat16),
        'b2': vec(ks[6], d).reshape(1, d),
        'g2': jnp.ones((1, d), jnp.float32),
        'be2': jnp.zeros((1, d), jnp.float32),
    }


def init_stage(key, d, num_layers):
    layers = [init_encoder_layer(k, d) for k in jax.random.split(key, num_layers)]
    return {name: jnp.stack([lyr[name] for lyr in layers], axis=0)
            for name in _STAGE_KEYS}


def init_params(key):
    d = 128                     # d_model = 128 -> lane-dense blocks everywhere
    cfg = dict(d_model=d, feat_dim=32, point_stride=4, temperature=0.1,
               num_matches=4,
               coarse_layer_names=('self', 'cross'),
               fine_layer_names=('self', 'cross'))
    ks = jax.random.split(key, 10)
    return {
        'cfg': cfg,
        'image_backbone': {'conv1': init_conv(ks[0], 1, d, 3),
                           'conv2': init_conv(ks[1], d, d, 3),
                           'conv3': init_conv(ks[2], d, d, 3),
                           'conv4': init_conv(ks[3], d, d, 3)},
        'point_backbone': {'fc1': init_linear(ks[4], cfg['feat_dim'], d),
                           'fc2': init_linear(ks[5], d, d),
                           'fc3': init_linear(ks[6], d, d)},
        'coarse_transformer': init_stage(ks[7], d, len(cfg['coarse_layer_names'])),
        'fine_transformer': init_stage(ks[8], d, len(cfg['fine_layer_names'])),
    }


def dglsnet_forward(params, data):
    cfg = params['cfg']
    d = cfg['d_model']
    image = data['image']                                        # [1,1,H,W] NCHW

    feats_image_c, feats_image_f = image_backbone(params['image_backbone'], image)
    feats_point_c, feats_point_f = point_backbone(params['point_backbone'],
                                                  data['features'],
                                                  cfg['point_stride'])

    hc, wc = feats_image_c.shape[1], feats_image_c.shape[2]
    hf, wf = feats_image_f.shape[1], feats_image_f.shape[2]
    data['hw_c'] = (hc, wc)
    data['hw_f'] = (hf, wf)
    data['scale_f_c'] = hf // hc
    data['scale_i_c'] = image.shape[2] // hc
    data['scale_i_f'] = image.shape[2] // hf
    data['point_stride'] = cfg['point_stride']

    fi_c = feats_image_c.reshape(1, hc * wc, d) + pos_encoding_2d(hc, wc, d)
    point_c = data['points'][-1][None]                           # [1, Nc, 3]
    fp_c = feats_point_c + pos_encoding_xy(point_c, d)

    # Coarse: transformer stack + L2-normalize + dual softmax — ONE kernel.
    conf = coarse_stage(fi_c, fp_c, params['coarse_transformer'],
                        cfg['coarse_layer_names'], d, cfg['temperature'])
    data['conf_matrix'] = conf

    # TODO(synk): reference uses confidence threshold + mutual-NN with a
    # dynamic number of matches; static top-K keeps shapes static on TPU.
    lp = conf.shape[2]
    mconf, idx = jax.lax.top_k(conf[0].reshape(-1), cfg['num_matches'])
    data['b_ids'] = jnp.zeros((cfg['num_matches'],), jnp.int32)
    data['i_ids'] = (idx // lp).astype(jnp.int32)
    data['j_ids'] = (idx % lp).astype(jnp.int32)
    data['mconf'] = mconf

    feat_iu, feat_pu = fine_preprocess(feats_image_f, feats_point_f, data)

    # Fine: transformer stack + expectation — ONE kernel, 2-step parallel grid.
    w = data['scale_f_c']
    ys, xs = jnp.meshgrid(jnp.arange(w, dtype=jnp.float32),
                          jnp.arange(w, dtype=jnp.float32), indexing='ij')
    grid = jnp.stack([xs.reshape(-1), ys.reshape(-1)], axis=-1)   # [w*w, 2]
    grid = (grid / (w - 1)) * 2.0 - 1.0                           # [-1, 1]
    grid_pad = jnp.pad(grid, ((0, 0), (0, 128 - 2)))              # lane-dense
    data['expec_f'] = fine_stage(feat_iu, feat_pu, grid_pad,
                                 params['fine_transformer'],
                                 cfg['fine_layer_names'], d)
    # TODO(synk): reference FineMatching may also emit an uncertainty (std)
    # channel; only the 2-D expectation is produced here.
    return data


if __name__ == "__main__":
    key = jax.random.PRNGKey(0)
    k_img, k_feat, k_pts, k_par = jax.random.split(key, 4)

    image = jax.random.normal(k_img, (1, 1, 32, 32), jnp.float32)   # NCHW
    n_fine_points = 64
    features = jax.random.normal(k_feat, (n_fine_points, 32), jnp.float32)
    fine_points = jax.random.uniform(k_pts, (n_fine_points, 3), jnp.float32) * 4.0
    coarse_points = fine_points[::4]                                # [16, 3]

    data = {'image': image,
            'features': features,
            'points': [fine_points, coarse_points]}

    params = init_params(k_par)
    out = dglsnet_forward(params, data)
    jax.block_until_ready((out['conf_matrix'], out['mconf'], out['expec_f']))
    print("KERNEL_OK")
</pallas_src>

<mosaic_0001>
module attributes {stable_mosaic.version = 11 : i64} {
  func.func @_linear_kernel(%arg0: i32, %arg1: memref<256x16xf32, #tpu.memory_space<vmem>>, %arg2: memref<16x128xbf16, #tpu.memory_space<vmem>>, %arg3: memref<1x128xf32, #tpu.memory_space<vmem>>, %arg4: memref<256x128xf32, #tpu.memory_space<vmem>>) attributes {dimension_semantics = [#tpu.dimension_semantics<parallel>], iteration_bounds = array<i64: 1>, scalar_prefetch = 0 : i64, scratch_operands = 0 : i64, tpu.core_type = #tpu.core_type<tc>, window_params = [{transform_indices = @transform_0, window_bounds = array<i64: 256, 16>}, {pipeline_mode = #tpu.pipeline_mode<synchronous>, transform_indices = @transform_1, window_bounds = array<i64: 16, 128>}, {pipeline_mode = #tpu.pipeline_mode<synchronous>, transform_indices = @transform_2, window_bounds = array<i64: 1, 128>}, {transform_indices = @transform_3, window_bounds = array<i64: 256, 128>}]} {
    %c0 = arith.constant 0 : index
    %c0_0 = arith.constant 0 : index
    %0 = vector.load %arg1[%c0, %c0_0] : memref<256x16xf32, #tpu.memory_space<vmem>>, vector<256x16xf32>
    %1 = arith.truncf %0 : vector<256x16xf32> to vector<256x16xbf16>
    %c0_1 = arith.constant 0 : index
    %c0_2 = arith.constant 0 : index
    %2 = vector.load %arg2[%c0_1, %c0_2] : memref<16x128xbf16, #tpu.memory_space<vmem>>, vector<16x128xbf16>
    %cst = arith.constant dense<0.000000e+00> : vector<256x128xf32>
    %3 = tpu.matmul %1, %2, %cst {dimension_numbers = #tpu.dot_dimension_numbers<[1], [0], [0], [1], [0, 0, 1, 1], [], []>} : vector<256x16xbf16>, vector<16x128xbf16>, vector<256x128xf32> -> vector<256x128xf32>
    %c0_3 = arith.constant 0 : index
    %c0_4 = arith.constant 0 : index
    %4 = vector.load %arg3[%c0_3, %c0_4] : memref<1x128xf32, #tpu.memory_space<vmem>>, vector<1x128xf32>
    %5 = vector.broadcast %4 : vector<1x128xf32> to vector<256x128xf32>
    %6 = arith.addf %3, %5 : vector<256x128xf32>
    %cst_5 = arith.constant 0.000000e+00 : f32
    %7 = vector.broadcast %cst_5 : f32 to vector<256x128xf32>
    %8 = arith.maximumf %6, %7 : vector<256x128xf32>
    %c0_6 = arith.constant 0 : index
    %c0_7 = arith.constant 0 : index
    %9 = vector.load %arg4[%c0_6, %c0_7] : memref<256x128xf32, #tpu.memory_space<vmem>>, vector<256x128xf32>
    tpu.vector_store %arg4[%c0_6, %c0_7], %8 {strides = array<i32>} : memref<256x128xf32, #tpu.memory_space<vmem>>, vector<256x128xf32>,
    return
  }
  func.func @transform_0(%arg0: i32) -> (i32, i32) {
    %c0_i32 = arith.constant 0 : i32
    %c0_i32_0 = arith.constant 0 : i32
    return %arg0, %c0_i32 : i32, i32
  }
  func.func @transform_1(%arg0: i32) -> (i32, i32) {
    %c0_i32 = arith.constant 0 : i32
    %c0_i32_0 = arith.constant 0 : i32
    %c0_i32_1 = arith.constant 0 : i32
    return %c0_i32, %c0_i32_0 : i32, i32
  }
  func.func @transform_2(%arg0: i32) -> (i32, i32) {
    %c0_i32 = arith.constant 0 : i32
    %c0_i32_0 = arith.constant 0 : i32
    %c0_i32_1 = arith.constant 0 : i32
    return %c0_i32, %c0_i32_0 : i32, i32
  }
  func.func @transform_3(%arg0: i32) -> (i32, i32) {
    %c0_i32 = arith.constant 0 : i32
    %c0_i32_0 = arith.constant 0 : i32
    return %arg0, %c0_i32 : i32, i32
  }
}

</mosaic_0001>

<llo_original>
// kernel: tpu_custom_call.1
$region0: #{tpu_custom_call.1}
  #allocation0 [shape = 'u32[]', space=smem, size = 0x4, offset = 0x4, fixed_abs, tag = 'smem constant byte address 0x4 - core index']
  #allocation1 [shape = 'u32[144,128]{1,0:T(1,128)}', space=vmem, size = 0x12000, scoped, tag = 'internal scratch']
  %s0 = inlined_call_operand.vmem [shape: f32[256,16], index: 0, kind: input, shape index: {}]
  %s1 = inlined_call_operand.vmem [shape: bf16[16,128], index: 1, kind: input, shape index: {}]
  %s2 = inlined_call_operand.vmem [shape: f32[1,128], index: 2, kind: input, shape index: {}]
  %s3 = inlined_call_operand.hbm [shape: f32[256,128], index: 3, kind: output, shape index: {}]
  %s4 = sld [smem:[#allocation0]]
  $region22: #{tpu_custom_call.1} parent=0
    _
  %s6 = ssub.s32 1, %s4
  %s7 = scalar_select 0, %s6, %s4
  $region1: #{tpu_custom_call.1} parent=0
    #allocation2 [shape = 'u8[131072]{0}', space=vmem, size = 0x20000, scoped, tag = 'output window, operand 0, single buffered']
    #allocation3 [shape = 's32[1]{0}', space=sflag, size = 0x4, scoped, tag = 'scoped memory for tpu_custom_call.1']
    %8 = vsyncpa [#allocation3], 0
    // Predicated region
    $region2: #{tpu_custom_call.1} parent=1 // pred_check
      _
    $region3: #{tpu_custom_call.1} parent=1 // pred_check_branch
      %10 = sbr.rel (0) target = $region5
    $region4: #{tpu_custom_call.1} parent=1 // pred_region
      _
    $region5: #{tpu_custom_call.1} parent=1 // pred_fallthru
      _
    // Predicated region
    $region6: #{tpu_custom_call.1} parent=1 // pred_check
      _
    $region7: #{tpu_custom_call.1} parent=1 // pred_check_branch
      %12 = sbr.rel (0) target = $region9
    $region8: #{tpu_custom_call.1} parent=1 // pred_region
      _
    $region9: #{tpu_custom_call.1} parent=1 // pred_fallthru
      _
    // Predicated region
    $region10: #{tpu_custom_call.1} parent=1 // pred_check
      _
    $region11: #{tpu_custom_call.1} parent=1 // pred_check_branch
      %14 = sbr.rel (0) target = $region13
    $region12: #{tpu_custom_call.1} parent=1 // pred_region
      _
    $region13: #{tpu_custom_call.1} parent=1 // pred_fallthru
      _
    %v16 = vld [vmem:[%s0] sm:$0xff]
    %v17 = vld [vmem:[%s0 + $0x8] sm:$0xff]
    %v18 = vld [vmem:[%s0 + $0x10] sm:$0xff]
    %v19 = vld [vmem:[%s0 + $0x18] sm:$0xff]
    %v20 = vld [vmem:[%s0 + $0x20] sm:$0xff]
    %v21 = vld [vmem:[%s0 + $0x28] sm:$0xff]
    %v22 = vld [vmem:[%s0 + $0x30] sm:$0xff]
    %v23 = vld [vmem:[%s0 + $0x38] sm:$0xff]
    %v24 = vld [vmem:[%s0 + $0x40] sm:$0xff]
    %v25 = vld [vmem:[%s0 + $0x48] sm:$0xff]
    %v26 = vld [vmem:[%s0 + $0x50] sm:$0xff]
    %v27 = vld [vmem:[%s0 + $0x58] sm:$0xff]
    %v28 = vld [vmem:[%s0 + $0x60] sm:$0xff]
    %v29 = vld [vmem:[%s0 + $0x68] sm:$0xff]
    %v30 = vld [vmem:[%s0 + $0x70] sm:$0xff]
    %v31 = vld [vmem:[%s0 + $0x78] sm:$0xff]
    %v32 = vld [vmem:[%s0 + $0x80] sm:$0xff]
    %v33 = vld [vmem:[%s0 + $0x88] sm:$0xff]
    %v34 = vld [vmem:[%s0 + $0x90] sm:$0xff]
    %v35 = vld [vmem:[%s0 + $0x98] sm:$0xff]
    %v36 = vld [vmem:[%s0 + $0xa0] sm:$0xff]
    %v37 = vld [vmem:[%s0 + $0xa8] sm:$0xff]
    %v38 = vld [vmem:[%s0 + $0xb0] sm:$0xff]
    %v39 = vld [vmem:[%s0 + $0xb8] sm:$0xff]
    %v40 = vld [vmem:[%s0 + $0xc0] sm:$0xff]
    %v41 = vld [vmem:[%s0 + $0xc8] sm:$0xff]
    %v42 = vld [vmem:[%s0 + $0xd0] sm:$0xff]
    %v43 = vld [vmem:[%s0 + $0xd8] sm:$0xff]
    %v44 = vld [vmem:[%s0 + $0xe0] sm:$0xff]
    %v45 = vld [vmem:[%s0 + $0xe8] sm:$0xff]
    %v46 = vld [vmem:[%s0 + $0xf0] sm:$0xff]
    %v47 = vld [vmem:[%s0 + $0xf8] sm:$0xff]
    %v48 = vpack.c.bf16 %v17, %v16
    %v49 = vpack.c.bf16 %v19, %v18
    %v50 = vpack.c.bf16 %v21, %v20
    %v51 = vpack.c.bf16 %v23, %v22
    %v52 = vpack.c.bf16 %v25, %v24
    %v53 = vpack.c.bf16 %v27, %v26
    %v54 = vpack.c.bf16 %v29, %v28
    %v55 = vpack.c.bf16 %v31, %v30
    %v56 = vpack.c.bf16 %v33, %v32
    %v57 = vpack.c.bf16 %v35, %v34
    %v58 = vpack.c.bf16 %v37, %v36
    %v59 = vpack.c.bf16 %v39, %v38
    %v60 = vpack.c.bf16 %v41, %v40
    %v61 = vpack.c.bf16 %v43, %v42
    %v62 = vpack.c.bf16 %v45, %v44
    %v63 = vpack.c.bf16 %v47, %v46
    %v64 = vld [vmem:[%s1] sm:$0xf]
    %v65 = vld [vmem:[%s1 + $0x4] sm:$0xf]
    %v66 = vld [vmem:[%s2] sm:$0x1]
    %v68 = vlaneseq
    %v69 = vshrl.u32 %v68, 7
    %v70 = vsub.s32 0, %v69
    %v71 = vrot.slane %v66, %v70
    %v75 = vunpack.c.l.b16 %v64
    %v76 = vunpack.c.l.b16 %v65
    %v77 = vpack.c.b16 %v76, %v75
    %vm79 = vcmask 130048
    %v81 = vsel %vm79, %v48, 0
    %v84 = vsel %vm79, %v49, 0
    %v87 = vsel %vm79, %v50, 0
    %v90 = vsel %vm79, %v51, 0
    %v93 = vsel %vm79, %v52, 0
    %v96 = vsel %vm79, %v53, 0
    %v99 = vsel %vm79, %v54, 0
    %v102 = vsel %vm79, %v55, 0
    %v105 = vsel %vm79, %v56, 0
    %v108 = vsel %vm79, %v57, 0
    %v111 = vsel %vm79, %v58, 0
    %v114 = vsel %vm79, %v59, 0
    %v117 = vsel %vm79, %v60, 0
    %v120 = vsel %vm79, %v61, 0
    %v123 = vsel %vm79, %v62, 0
    %v126 = vsel %vm79, %v63, 0
    %128 = vmatprep.subr.bf16.mxu0 0
    %129 = vmatpush1.bf16.msra.mxu0 %v77
    %130 = vmatprep.subr.bf16.mxu0 0
    %131 = vmatpush1.bf16.msra.mxu0 0
    %132 = vmatprep.subr.bf16.mxu0 0
    %133 = vmatpush1.bf16.msra.mxu0 0
    %134 = vmatprep.subr.bf16.mxu0 0
    %135 = vmatpush1.bf16.msra.mxu0 0
    %136 = vmatprep.subr.bf16.mxu0 0
    %137 = vmatpush1.bf16.msra.mxu0 0
    %138 = vmatprep.subr.bf16.mxu0 0
    %139 = vmatpush1.bf16.msra.mxu0 0
    %140 = vmatprep.subr.bf16.mxu0 0
    %141 = vmatpush1.bf16.msra.mxu0 0
    %142 = vmatprep.subr.bf16.mxu0 0
    %143 = vmatpush1.bf16.msra.mxu0 0
    %144 = vmatprep.subr.bf16.mxu0 0
    %145 = vmatpush1.bf16.msra.mxu0 0
    %146 = vmatprep.subr.bf16.mxu0 0
    %147 = vmatpush1.bf16.msra.mxu0 0
    %148 = vmatprep.subr.bf16.mxu0 0
    %149 = vmatpush1.bf16.msra.mxu0 0
    %150 = vmatprep.subr.bf16.mxu0 0
    %151 = vmatpush1.bf16.msra.mxu0 0
    %152 = vmatprep.subr.bf16.mxu0 0
    %153 = vmatpush1.bf16.msra.mxu0 0
    %154 = vmatprep.subr.bf16.mxu0 0
    %155 = vmatpush1.bf16.msra.mxu0 0
    %156 = vmatprep.subr.bf16.mxu0 0
    %157 = vmatpush1.bf16.msra.mxu0 0
    %158 = vmatprep.subr.bf16.mxu0 0
    %159 = vmatpush1.bf16.msra.mxu0 0
    %160 = vmatprep.mubr.bf16.mxu0 0
    %161 = vmatmul.mubr.bf16.gmra.mrb[0].mxu0 %v81
    %v162 = vpop.f32.mrb[0].mxu0
    %v163 = vadd.f32 %v71, %v162
    %v164 = vpop.f32.mrb[0].mxu0
    %v165 = vpop.f32.mrb[0].mxu0
    %v166 = vadd.f32 %v71, %v165
    %v167 = vpop.f32.mrb[0].mxu0
    %168 = vmatprep.mubr.bf16.mxu0 0
    %169 = vmatmul.mubr.bf16.gmra.mrb[0].mxu0 %v84
    %v170 = vpop.f32.mrb[0].mxu0
    %v171 = vadd.f32 %v71, %v170
    %v172 = vpop.f32.mrb[0].mxu0
    %v173 = vpop.f32.mrb[0].mxu0
    %v174 = vadd.f32 %v71, %v173
    %v175 = vpop.f32.mrb[0].mxu0
    %176 = vmatprep.mubr.bf16.mxu0 0
    %177 = vmatmul.mubr.bf16.gmra.mrb[0].mxu0 %v87
    %v178 = vpop.f32.mrb[0].mxu0
    %v179 = vadd.f32 %v71, %v178
    %v180 = vpop.f32.mrb[0].mxu0
    %v181 = vpop.f32.mrb[0].mxu0
    %v182 = vadd.f32 %v71, %v181
    %v183 = vpop.f32.mrb[0].mxu0
    %184 = vmatprep.mubr.bf16.mxu0 0
    %185 = vmatmul.mubr.bf16.gmra.mrb[0].mxu0 %v90
    %v186 = vpop.f32.mrb[0].mxu0
    %v187 = vadd.f32 %v71, %v186
    %v188 = vpop.f32.mrb[0].mxu0
    %v189 = vpop.f32.mrb[0].mxu0
    %v190 = vadd.f32 %v71, %v189
    %v191 = vpop.f32.mrb[0].mxu0
    %192 = vmatprep.mubr.bf16.mxu0 0
    %193 = vmatmul.mubr.bf16.gmra.mrb[0].mxu0 %v93
    %v194 = vpop.f32.mrb[0].mxu0
    %v195 = vadd.f32 %v71, %v194
    %v196 = vpop.f32.mrb[0].mxu0
    %v197 = vpop.f32.mrb[0].mxu0
    %v198 = vadd.f32 %v71, %v197
    %v199 = vpop.f32.mrb[0].mxu0
    %200 = vmatprep.mubr.bf16.mxu0 0
    %201 = vmatmul.mubr.bf16.gmra.mrb[0].mxu0 %v96
    %v202 = vpop.f32.mrb[0].mxu0
    %v203 = vadd.f32 %v71, %v202
    %v204 = vpop.f32.mrb[0].mxu0
    %v205 = vpop.f32.mrb[0].mxu0
    %v206 = vadd.f32 %v71, %v205
    %v207 = vpop.f32.mrb[0].mxu0
    %208 = vmatprep.mubr.bf16.mxu0 0
    %209 = vmatmul.mubr.bf16.gmra.mrb[0].mxu0 %v99
    %v210 = vpop.f32.mrb[0].mxu0
    %v211 = vadd.f32 %v71, %v210
    %v212 = vpop.f32.mrb[0].mxu0
    %v213 = vpop.f32.mrb[0].mxu0
    %v214 = vadd.f32 %v71, %v213
    %v215 = vpop.f32.mrb[0].mxu0
    %216 = vmatprep.mubr.bf16.mxu0 0
    %217 = vmatmul.mubr.bf16.gmra.mrb[0].mxu0 %v102
    %v218 = vpop.f32.mrb[0].mxu0
    %v219 = vadd.f32 %v71, %v218
    %v220 = vpop.f32.mrb[0].mxu0
    %v221 = vpop.f32.mrb[0].mxu0
    %v222 = vadd.f32 %v71, %v221
    %v223 = vpop.f32.mrb[0].mxu0
    %224 = vmatprep.mubr.bf16.mxu0 0
    %225 = vmatmul.mubr.bf16.gmra.mrb[0].mxu0 %v105
    %v226 = vpop.f32.mrb[0].mxu0
    %v227 = vadd.f32 %v71, %v226
    %v228 = vpop.f32.mrb[0].mxu0
    %v229 = vpop.f32.mrb[0].mxu0
    %v230 = vadd.f32 %v71, %v229
    %v231 = vpop.f32.mrb[0].mxu0
    %232 = vmatprep.mubr.bf16.mxu0 0
    %233 = vmatmul.mubr.bf16.gmra.mrb[0].mxu0 %v108
    %v234 = vpop.f32.mrb[0].mxu0
    %v235 = vadd.f32 %v71, %v234
    %v236 = vpop.f32.mrb[0].mxu0
    %v237 = vpop.f32.mrb[0].mxu0
    %v238 = vadd.f32 %v71, %v237
    %v239 = vpop.f32.mrb[0].mxu0
    %240 = vmatprep.mubr.bf16.mxu0 0
    %241 = vmatmul.mubr.bf16.gmra.mrb[0].mxu0 %v111
    %v242 = vpop.f32.mrb[0].mxu0
    %v243 = vadd.f32 %v71, %v242
    %v244 = vpop.f32.mrb[0].mxu0
    %v245 = vpop.f32.mrb[0].mxu0
    %v246 = vadd.f32 %v71, %v245
    %v247 = vpop.f32.mrb[0].mxu0
    %248 = vmatprep.mubr.bf16.mxu0 0
    %249 = vmatmul.mubr.bf16.gmra.mrb[0].mxu0 %v114
    %v250 = vpop.f32.mrb[0].mxu0
    %v251 = vadd.f32 %v71, %v250
    %v252 = vpop.f32.mrb[0].mxu0
    %v253 = vpop.f32.mrb[0].mxu0
    %v254 = vadd.f32 %v71, %v253
    %v255 = vpop.f32.mrb[0].mxu0
    %256 = vmatprep.mubr.bf16.mxu0 0
    %257 = vmatmul.mubr.bf16.gmra.mrb[0].mxu0 %v117
    %v258 = vpop.f32.mrb[0].mxu0
    %v259 = vadd.f32 %v71, %v258
    %v260 = vpop.f32.mrb[0].mxu0
    %v261 = vpop.f32.mrb[0].mxu0
    %v262 = vadd.f32 %v71, %v261
    %v263 = vpop.f32.mrb[0].mxu0
    %264 = vmatprep.mubr.bf16.mxu0 0
    %265 = vmatmul.mubr.bf16.gmra.mrb[0].mxu0 %v120
    %v266 = vpop.f32.mrb[0].mxu0
    %v267 = vadd.f32 %v71, %v266
    %v268 = vpop.f32.mrb[0].mxu0
    %v269 = vpop.f32.mrb[0].mxu0
    %v270 = vadd.f32 %v71, %v269
    %v271 = vpop.f32.mrb[0].mxu0
    %272 = vmatprep.mubr.bf16.mxu0 0
    %273 = vmatmul.mubr.bf16.gmra.mrb[0].mxu0 %v123
    %v274 = vpop.f32.mrb[0].mxu0
    %v275 = vadd.f32 %v71, %v274
    %v276 = vpop.f32.mrb[0].mxu0
    %v277 = vpop.f32.mrb[0].mxu0
    %v278 = vadd.f32 %v71, %v277
    %v279 = vpop.f32.mrb[0].mxu0
    %280 = vmatprep.mubr.bf16.mxu0 0
    %281 = vmatmul.mubr.bf16.gmra.mrb[0].mxu0 %v126
    %v282 = vpop.f32.mrb[0].mxu0
    %v283 = vadd.f32 %v71, %v282
    %v284 = vpop.f32.mrb[0].mxu0
    %v285 = vpop.f32.mrb[0].mxu0
    %v286 = vadd.f32 %v71, %v285
    %v287 = vpop.f32.mrb[0].mxu0
    %288 = vdwg.mxu0
    %v289 = vmax.f32 %v163, 0.0
    %v290 = vmax.f32 %v166, 0.0
    %v291 = vmax.f32 %v171, 0.0
    %v292 = vmax.f32 %v174, 0.0
    %v293 = vmax.f32 %v179, 0.0
    %v294 = vmax.f32 %v182, 0.0
    %v295 = vmax.f32 %v187, 0.0
    %v296 = vmax.f32 %v190, 0.0
    %v297 = vmax.f32 %v195, 0.0
    %v298 = vmax.f32 %v198, 0.0
    %v299 = vmax.f32 %v203, 0.0
    %v300 = vmax.f32 %v206, 0.0
    %v301 = vmax.f32 %v211, 0.0
    %v302 = vmax.f32 %v214, 0.0
    %v303 = vmax.f32 %v219, 0.0
    %v304 = vmax.f32 %v222, 0.0
    %v305 = vmax.f32 %v227, 0.0
    %v306 = vmax.f32 %v230, 0.0
    %v307 = vmax.f32 %v235, 0.0
    %v308 = vmax.f32 %v238, 0.0
    %v309 = vmax.f32 %v243, 0.0
    %v310 = vmax.f32 %v246, 0.0
    %v311 = vmax.f32 %v251, 0.0
    %v312 = vmax.f32 %v254, 0.0
    %v313 = vmax.f32 %v259, 0.0
    %v314 = vmax.f32 %v262, 0.0
    %v315 = vmax.f32 %v267, 0.0
    %v316 = vmax.f32 %v270, 0.0
    %v317 = vmax.f32 %v275, 0.0
    %v318 = vmax.f32 %v278, 0.0
    %v319 = vmax.f32 %v283, 0.0
    %v320 = vmax.f32 %v286, 0.0
    %321 = vst [vmem:[#allocation2] sm:$0xff] %v289
    %322 = vst [vmem:[#allocation2 + $0x8] sm:$0xff] %v290
    %323 = vst [vmem:[#allocation2 + $0x10] sm:$0xff] %v291
    %324 = vst [vmem:[#allocation2 + $0x18] sm:$0xff] %v292
    %325 = vst [vmem:[#allocation2 + $0x20] sm:$0xff] %v293
    %326 = vst [vmem:[#allocation2 + $0x28] sm:$0xff] %v294
    %327 = vst [vmem:[#allocation2 + $0x30] sm:$0xff] %v295
    %328 = vst [vmem:[#allocation2 + $0x38] sm:$0xff] %v296
    %329 = vst [vmem:[#allocation2 + $0x40] sm:$0xff] %v297
    %330 = vst [vmem:[#allocation2 + $0x48] sm:$0xff] %v298
    %331 = vst [vmem:[#allocation2 + $0x50] sm:$0xff] %v299
    %332 = vst [vmem:[#allocation2 + $0x58] sm:$0xff] %v300
    %333 = vst [vmem:[#allocation2 + $0x60] sm:$0xff] %v301
    %334 = vst [vmem:[#allocation2 + $0x68] sm:$0xff] %v302
    %335 = vst [vmem:[#allocation2 + $0x70] sm:$0xff] %v303
    %336 = vst [vmem:[#allocation2 + $0x78] sm:$0xff] %v304
    %337 = vst [vmem:[#allocation2 + $0x80] sm:$0xff] %v305
    %338 = vst [vmem:[#allocation2 + $0x88] sm:$0xff] %v306
    %339 = vst [vmem:[#allocation2 + $0x90] sm:$0xff] %v307
    %340 = vst [vmem:[#allocation2 + $0x98] sm:$0xff] %v308
    %341 = vst [vmem:[#allocation2 + $0xa0] sm:$0xff] %v309
    %342 = vst [vmem:[#allocation2 + $0xa8] sm:$0xff] %v310
    %343 = vst [vmem:[#allocation2 + $0xb0] sm:$0xff] %v311
    %344 = vst [vmem:[#allocation2 + $0xb8] sm:$0xff] %v312
    %345 = vst [vmem:[#allocation2 + $0xc0] sm:$0xff] %v313
    %346 = vst [vmem:[#allocation2 + $0xc8] sm:$0xff] %v314
    %347 = vst [vmem:[#allocation2 + $0xd0] sm:$0xff] %v315
    %348 = vst [vmem:[#allocation2 + $0xd8] sm:$0xff] %v316
    %349 = vst [vmem:[#allocation2 + $0xe0] sm:$0xff] %v317
    %350 = vst [vmem:[#allocation2 + $0xe8] sm:$0xff] %v318
    %351 = vst [vmem:[#allocation2 + $0xf0] sm:$0xff] %v319
    %352 = vst [vmem:[#allocation2 + $0xf8] sm:$0xff] %v320
    // Predicated region
    $region14: #{tpu_custom_call.1} parent=1 // pred_check
      _
    $region15: #{tpu_custom_call.1} parent=1 // pred_check_branch
      %354 = sbr.rel (0) target = $region17
    $region16: #{tpu_custom_call.1} parent=1 // pred_region
      %s356 = ssub.s32 4096, 4096
      %357 = vsyncadd [#allocation3], %s356
      %s358 = sshll.u32 [#allocation2], 4
      %s359 = int_to_ptr.vmem [resolvable:$true] %s358
      %364 = dma.vmem_to_hbm [thread:$0]  %s359, 4096, %s3, [#allocation3], 128, 128, 8
    $region17: #{tpu_custom_call.1} parent=1 // pred_fallthru
      _
    // Predicated region
    $region18: #{tpu_custom_call.1} parent=1 // pred_check
      _
    $region19: #{tpu_custom_call.1} parent=1 // pred_check_branch
      %366 = sbr.rel (0) target = $region21
    $region20: #{tpu_custom_call.1} parent=1 // pred_region
      %367 = dma.done [#allocation3], 4096
    $region21: #{tpu_custom_call.1} parent=1 // pred_fallthru
      _
    %368 = vsyncpa [#allocation3], 1

</llo_original>
